<compile_context>
chip_gen: v7x
topology: tpu7x:2x2x1
jax: 0.10.0
libtpu: 0.0.40
codegen_flags: <defaults>
</compile_context>

<pallas_src>
import jax
import jax.numpy as jnp
from jax.experimental import pallas as pl
from jax.experimental.pallas import tpu as pltpu

_BLOCK_BYTES = 8 * 1024 * 1024      # target per-output-block footprint (~8 MiB)
_VMEM_LIMIT = 48 * 1024 * 1024      # safe on v7x (64 MiB phys) and v5e/v6e (128 MiB)
_MAX_TM = 2048


def _round_up(v, mult):
    return ((v + mult - 1) // mult) * mult


def _pick_tm(m_rows, lane_width, itemsize):
    """Row tile: multiple of 8, ~_BLOCK_BYTES output block, capped by the array."""
    tm = _BLOCK_BYTES // (lane_width * itemsize)
    tm = max(8, (tm // 8) * 8)
    tm = min(tm, _MAX_TM)
    tm = min(tm, _round_up(m_rows, 8))
    return int(tm)


def _onehot_packed_kernel(x_ref, o_ref):
    # x_ref: (tm, R) int32 indices (R original rows packed per kernel row).
    # o_ref: (tm, R*N); lane l <-> (orig row = row*R + l//N, class = l % N).
    tm, w = o_ref.shape
    r = x_ref.shape[1]
    n = w // r
    lane = jax.lax.broadcasted_iota(jnp.int32, (tm, w), 1)
    acc = None
    for g in range(r):                                    # static unroll, R <= 16
        idx = x_ref[:, g:g + 1]                           # (tm, 1)
        # Sanitize OOR/negative indices so they can never match any lane.
        idx = jnp.where((idx >= 0) & (idx < n), idx + g * n, -1)
        match = lane == idx                               # (tm, w) bool
        acc = match if acc is None else (acc | match)
    o_ref[...] = acc.astype(o_ref.dtype)


def _onehot_kernel(x_ref, o_ref):
    # x_ref: (tm, 1) int32; o_ref: (tm, tn) = vocab slice [j*tn, j*tn + tn).
    tm, tn = o_ref.shape
    base = pl.program_id(1) * tn
    lane = jax.lax.broadcasted_iota(jnp.int32, (tm, tn), 1) + base
    o_ref[...] = (lane == x_ref[...]).astype(o_ref.dtype)


def one_hot_pallas(x, num_embeddings, *, out_dtype=jnp.float32):
    """Equivalent of OneHot(num_embeddings)(x) for an integer tensor x."""
    n = int(num_embeddings)
    orig_shape = x.shape
    x_flat = x.reshape(-1).astype(jnp.int32)
    m = x_flat.shape[0]
    itemsize = jnp.dtype(out_dtype).itemsize

    if m == 0:
        return jnp.zeros(orig_shape + (n,), dtype=out_dtype)

    # Lane-dense packed path for small vocabularies.
    r = 128 // n if (n < 128 and 128 % n == 0) else 1
    r = r if r <= 16 else 1                     # keep the static unroll small
    if r > 1 and m % r == 0:
        m_rows = m // r
        w = r * n                               # == 128 (full lane width)
        x2d = x_flat.reshape(m_rows, r)
        tm = _pick_tm(m_rows, w, itemsize)
        out = pl.pallas_call(
            _onehot_packed_kernel,
            out_shape=jax.ShapeDtypeStruct((m_rows, w), out_dtype),
            grid_spec=pltpu.PrefetchScalarGridSpec(
                num_scalar_prefetch=0,
                grid=(pl.cdiv(m_rows, tm),),
                in_specs=[pl.BlockSpec((tm, r), lambda i: (i, 0))],
                out_specs=pl.BlockSpec((tm, w), lambda i: (i, 0)),
            ),
            compiler_params=pltpu.CompilerParams(
                dimension_semantics=("parallel",),
                vmem_limit_bytes=_VMEM_LIMIT,
            ),
        )(x2d)
        return out.reshape(orig_shape + (n,))

    # Generic path: tile rows; additionally tile the vocab axis when large so
    # the row tile can stay big for any N.
    x2d = x_flat.reshape(m, 1)
    tn = n if n <= 2048 else 2048               # 2048 is a multiple of 128
    tm = _pick_tm(m, tn, itemsize)
    out = pl.pallas_call(
        _onehot_kernel,
        out_shape=jax.ShapeDtypeStruct((m, n), out_dtype),
        grid_spec=pltpu.PrefetchScalarGridSpec(
            num_scalar_prefetch=0,
            grid=(pl.cdiv(m, tm), pl.cdiv(n, tn)),
            in_specs=[pl.BlockSpec((tm, 1), lambda i, j: (i, 0))],
            out_specs=pl.BlockSpec((tm, tn), lambda i, j: (i, j)),
        ),
        compiler_params=pltpu.CompilerParams(
            dimension_semantics=("parallel", "parallel"),
            vmem_limit_bytes=_VMEM_LIMIT,
        ),
    )(x2d)
    return out.reshape(orig_shape + (n,))


if __name__ == "__main__":
    key = jax.random.PRNGKey(0)
    k1, k2 = jax.random.split(key)

    # Case 1: small vocab (lane-dense packed path), N=16, x shape (2, 8, 16).
    n1 = 16
    x1 = jax.random.randint(k1, (2, 8, 16), 0, n1, dtype=jnp.int32)
    y1 = jax.block_until_ready(one_hot_pallas(x1, n1))
    ref1 = jax.nn.one_hot(x1, n1, dtype=jnp.float32)
    assert y1.shape == x1.shape + (n1,), y1.shape
    assert y1.dtype == jnp.float32, y1.dtype
    assert jnp.array_equal(y1, ref1), "packed path mismatch vs reference one-hot"

    # Case 2: vocab >= 128 (generic tiled path, partial row block), N=160.
    n2 = 160
    x2 = jax.random.randint(k2, (4, 50), 0, n2, dtype=jnp.int32)
    y2 = jax.block_until_ready(one_hot_pallas(x2, n2))
    ref2 = jax.nn.one_hot(x2, n2, dtype=jnp.float32)
    assert y2.shape == x2.shape + (n2,), y2.shape
    assert jnp.array_equal(y2, ref2), "generic path mismatch vs reference one-hot"

    print("KERNEL_OK")
</pallas_src>

<mosaic_0001>
module attributes {stable_mosaic.version = 11 : i64} {
  func.func @_onehot_packed_kernel(%arg0: i32, %arg1: memref<32x8xi32, #tpu.memory_space<vmem>>, %arg2: memref<32x128xf32, #tpu.memory_space<vmem>>) attributes {dimension_semantics = [#tpu.dimension_semantics<parallel>], iteration_bounds = array<i64: 1>, scalar_prefetch = 0 : i64, scratch_operands = 0 : i64, tpu.core_type = #tpu.core_type<tc>, window_params = [{transform_indices = @transform_0, window_bounds = array<i64: 32, 8>}, {transform_indices = @transform_1, window_bounds = array<i64: 32, 128>}]} {
    %0 = tpu.iota {dimensions = array<i32: 1>} : vector<32x128xi32>
    %c0 = arith.constant 0 : index
    %c0_0 = arith.constant 0 : index
    %1 = vector.load %arg1[%c0, %c0_0] : memref<32x8xi32, #tpu.memory_space<vmem>>, vector<32x1xi32>
    %c0_i32 = arith.constant 0 : i32
    %2 = vector.broadcast %c0_i32 : i32 to vector<32x1xi32>
    %3 = arith.cmpi sge, %1, %2 : vector<32x1xi32>
    %c16_i32 = arith.constant 16 : i32
    %4 = vector.broadcast %c16_i32 : i32 to vector<32x1xi32>
    %5 = arith.cmpi slt, %1, %4 : vector<32x1xi32>
    %6 = arith.andi %3, %5 : vector<32x1xi1>
    %c0_i32_1 = arith.constant 0 : i32
    %7 = vector.broadcast %c0_i32_1 : i32 to vector<32x1xi32>
    %8 = arith.addi %1, %7 : vector<32x1xi32>
    %c-1_i32 = arith.constant -1 : i32
    %9 = vector.broadcast %c-1_i32 : i32 to vector<32x1xi32>
    %10 = arith.select %6, %8, %9 : vector<32x1xi1>, vector<32x1xi32>
    %11 = vector.broadcast %10 : vector<32x1xi32> to vector<32x128xi32>
    %12 = arith.cmpi eq, %0, %11 : vector<32x128xi32>
    %c0_2 = arith.constant 0 : index
    %c1 = arith.constant 1 : index
    %13 = vector.load %arg1[%c0_2, %c1] : memref<32x8xi32, #tpu.memory_space<vmem>>, vector<32x1xi32>
    %c0_i32_3 = arith.constant 0 : i32
    %14 = vector.broadcast %c0_i32_3 : i32 to vector<32x1xi32>
    %15 = arith.cmpi sge, %13, %14 : vector<32x1xi32>
    %c16_i32_4 = arith.constant 16 : i32
    %16 = vector.broadcast %c16_i32_4 : i32 to vector<32x1xi32>
    %17 = arith.cmpi slt, %13, %16 : vector<32x1xi32>
    %18 = arith.andi %15, %17 : vector<32x1xi1>
    %c16_i32_5 = arith.constant 16 : i32
    %19 = vector.broadcast %c16_i32_5 : i32 to vector<32x1xi32>
    %20 = arith.addi %13, %19 : vector<32x1xi32>
    %c-1_i32_6 = arith.constant -1 : i32
    %21 = vector.broadcast %c-1_i32_6 : i32 to vector<32x1xi32>
    %22 = arith.select %18, %20, %21 : vector<32x1xi1>, vector<32x1xi32>
    %23 = vector.broadcast %22 : vector<32x1xi32> to vector<32x128xi32>
    %24 = arith.cmpi eq, %0, %23 : vector<32x128xi32>
    %25 = arith.ori %12, %24 : vector<32x128xi1>
    %c0_7 = arith.constant 0 : index
    %c2 = arith.constant 2 : index
    %26 = vector.load %arg1[%c0_7, %c2] : memref<32x8xi32, #tpu.memory_space<vmem>>, vector<32x1xi32>
    %c0_i32_8 = arith.constant 0 : i32
    %27 = vector.broadcast %c0_i32_8 : i32 to vector<32x1xi32>
    %28 = arith.cmpi sge, %26, %27 : vector<32x1xi32>
    %c16_i32_9 = arith.constant 16 : i32
    %29 = vector.broadcast %c16_i32_9 : i32 to vector<32x1xi32>
    %30 = arith.cmpi slt, %26, %29 : vector<32x1xi32>
    %31 = arith.andi %28, %30 : vector<32x1xi1>
    %c32_i32 = arith.constant 32 : i32
    %32 = vector.broadcast %c32_i32 : i32 to vector<32x1xi32>
    %33 = arith.addi %26, %32 : vector<32x1xi32>
    %c-1_i32_10 = arith.constant -1 : i32
    %34 = vector.broadcast %c-1_i32_10 : i32 to vector<32x1xi32>
    %35 = arith.select %31, %33, %34 : vector<32x1xi1>, vector<32x1xi32>
    %36 = vector.broadcast %35 : vector<32x1xi32> to vector<32x128xi32>
    %37 = arith.cmpi eq, %0, %36 : vector<32x128xi32>
    %38 = arith.ori %25, %37 : vector<32x128xi1>
    %c0_11 = arith.constant 0 : index
    %c3 = arith.constant 3 : index
    %39 = vector.load %arg1[%c0_11, %c3] : memref<32x8xi32, #tpu.memory_space<vmem>>, vector<32x1xi32>
    %c0_i32_12 = arith.constant 0 : i32
    %40 = vector.broadcast %c0_i32_12 : i32 to vector<32x1xi32>
    %41 = arith.cmpi sge, %39, %40 : vector<32x1xi32>
    %c16_i32_13 = arith.constant 16 : i32
    %42 = vector.broadcast %c16_i32_13 : i32 to vector<32x1xi32>
    %43 = arith.cmpi slt, %39, %42 : vector<32x1xi32>
    %44 = arith.andi %41, %43 : vector<32x1xi1>
    %c48_i32 = arith.constant 48 : i32
    %45 = vector.broadcast %c48_i32 : i32 to vector<32x1xi32>
    %46 = arith.addi %39, %45 : vector<32x1xi32>
    %c-1_i32_14 = arith.constant -1 : i32
    %47 = vector.broadcast %c-1_i32_14 : i32 to vector<32x1xi32>
    %48 = arith.select %44, %46, %47 : vector<32x1xi1>, vector<32x1xi32>
    %49 = vector.broadcast %48 : vector<32x1xi32> to vector<32x128xi32>
    %50 = arith.cmpi eq, %0, %49 : vector<32x128xi32>
    %51 = arith.ori %38, %50 : vector<32x128xi1>
    %c0_15 = arith.constant 0 : index
    %c4 = arith.constant 4 : index
    %52 = vector.load %arg1[%c0_15, %c4] : memref<32x8xi32, #tpu.memory_space<vmem>>, vector<32x1xi32>
    %c0_i32_16 = arith.constant 0 : i32
    %53 = vector.broadcast %c0_i32_16 : i32 to vector<32x1xi32>
    %54 = arith.cmpi sge, %52, %53 : vector<32x1xi32>
    %c16_i32_17 = arith.constant 16 : i32
    %55 = vector.broadcast %c16_i32_17 : i32 to vector<32x1xi32>
    %56 = arith.cmpi slt, %52, %55 : vector<32x1xi32>
    %57 = arith.andi %54, %56 : vector<32x1xi1>
    %c64_i32 = arith.constant 64 : i32
    %58 = vector.broadcast %c64_i32 : i32 to vector<32x1xi32>
    %59 = arith.addi %52, %58 : vector<32x1xi32>
    %c-1_i32_18 = arith.constant -1 : i32
    %60 = vector.broadcast %c-1_i32_18 : i32 to vector<32x1xi32>
    %61 = arith.select %57, %59, %60 : vector<32x1xi1>, vector<32x1xi32>
    %62 = vector.broadcast %61 : vector<32x1xi32> to vector<32x128xi32>
    %63 = arith.cmpi eq, %0, %62 : vector<32x128xi32>
    %64 = arith.ori %51, %63 : vector<32x128xi1>
    %c0_19 = arith.constant 0 : index
    %c5 = arith.constant 5 : index
    %65 = vector.load %arg1[%c0_19, %c5] : memref<32x8xi32, #tpu.memory_space<vmem>>, vector<32x1xi32>
    %c0_i32_20 = arith.constant 0 : i32
    %66 = vector.broadcast %c0_i32_20 : i32 to vector<32x1xi32>
    %67 = arith.cmpi sge, %65, %66 : vector<32x1xi32>
    %c16_i32_21 = arith.constant 16 : i32
    %68 = vector.broadcast %c16_i32_21 : i32 to vector<32x1xi32>
    %69 = arith.cmpi slt, %65, %68 : vector<32x1xi32>
    %70 = arith.andi %67, %69 : vector<32x1xi1>
    %c80_i32 = arith.constant 80 : i32
    %71 = vector.broadcast %c80_i32 : i32 to vector<32x1xi32>
    %72 = arith.addi %65, %71 : vector<32x1xi32>
    %c-1_i32_22 = arith.constant -1 : i32
    %73 = vector.broadcast %c-1_i32_22 : i32 to vector<32x1xi32>
    %74 = arith.select %70, %72, %73 : vector<32x1xi1>, vector<32x1xi32>
    %75 = vector.broadcast %74 : vector<32x1xi32> to vector<32x128xi32>
    %76 = arith.cmpi eq, %0, %75 : vector<32x128xi32>
    %77 = arith.ori %64, %76 : vector<32x128xi1>
    %c0_23 = arith.constant 0 : index
    %c6 = arith.constant 6 : index
    %78 = vector.load %arg1[%c0_23, %c6] : memref<32x8xi32, #tpu.memory_space<vmem>>, vector<32x1xi32>
    %c0_i32_24 = arith.constant 0 : i32
    %79 = vector.broadcast %c0_i32_24 : i32 to vector<32x1xi32>
    %80 = arith.cmpi sge, %78, %79 : vector<32x1xi32>
    %c16_i32_25 = arith.constant 16 : i32
    %81 = vector.broadcast %c16_i32_25 : i32 to vector<32x1xi32>
    %82 = arith.cmpi slt, %78, %81 : vector<32x1xi32>
    %83 = arith.andi %80, %82 : vector<32x1xi1>
    %c96_i32 = arith.constant 96 : i32
    %84 = vector.broadcast %c96_i32 : i32 to vector<32x1xi32>
    %85 = arith.addi %78, %84 : vector<32x1xi32>
    %c-1_i32_26 = arith.constant -1 : i32
    %86 = vector.broadcast %c-1_i32_26 : i32 to vector<32x1xi32>
    %87 = arith.select %83, %85, %86 : vector<32x1xi1>, vector<32x1xi32>
    %88 = vector.broadcast %87 : vector<32x1xi32> to vector<32x128xi32>
    %89 = arith.cmpi eq, %0, %88 : vector<32x128xi32>
    %90 = arith.ori %77, %89 : vector<32x128xi1>
    %c0_27 = arith.constant 0 : index
    %c7 = arith.constant 7 : index
    %91 = vector.load %arg1[%c0_27, %c7] : memref<32x8xi32, #tpu.memory_space<vmem>>, vector<32x1xi32>
    %c0_i32_28 = arith.constant 0 : i32
    %92 = vector.broadcast %c0_i32_28 : i32 to vector<32x1xi32>
    %93 = arith.cmpi sge, %91, %92 : vector<32x1xi32>
    %c16_i32_29 = arith.constant 16 : i32
    %94 = vector.broadcast %c16_i32_29 : i32 to vector<32x1xi32>
    %95 = arith.cmpi slt, %91, %94 : vector<32x1xi32>
    %96 = arith.andi %93, %95 : vector<32x1xi1>
    %c112_i32 = arith.constant 112 : i32
    %97 = vector.broadcast %c112_i32 : i32 to vector<32x1xi32>
    %98 = arith.addi %91, %97 : vector<32x1xi32>
    %c-1_i32_30 = arith.constant -1 : i32
    %99 = vector.broadcast %c-1_i32_30 : i32 to vector<32x1xi32>
    %100 = arith.select %96, %98, %99 : vector<32x1xi1>, vector<32x1xi32>
    %101 = vector.broadcast %100 : vector<32x1xi32> to vector<32x128xi32>
    %102 = arith.cmpi eq, %0, %101 : vector<32x128xi32>
    %103 = arith.ori %90, %102 : vector<32x128xi1>
    %104 = arith.extui %103 : vector<32x128xi1> to vector<32x128xi32>
    %105 = arith.sitofp %104 : vector<32x128xi32> to vector<32x128xf32>
    %c0_31 = arith.constant 0 : index
    %c0_32 = arith.constant 0 : index
    %106 = vector.load %arg2[%c0_31, %c0_32] : memref<32x128xf32, #tpu.memory_space<vmem>>, vector<32x128xf32>
    tpu.vector_store %arg2[%c0_31, %c0_32], %105 {strides = array<i32>} : memref<32x128xf32, #tpu.memory_space<vmem>>, vector<32x128xf32>,
    return
  }
  func.func @transform_0(%arg0: i32) -> (i32, i32) {
    %c0_i32 = arith.constant 0 : i32
    %c0_i32_0 = arith.constant 0 : i32
    return %arg0, %c0_i32 : i32, i32
  }
  func.func @transform_1(%arg0: i32) -> (i32, i32) {
    %c0_i32 = arith.constant 0 : i32
    %c0_i32_0 = arith.constant 0 : i32
    return %arg0, %c0_i32 : i32, i32
  }
}

</mosaic_0001>

<llo_original>
// kernel: tpu_custom_call.1
$region0: #{tpu_custom_call.1}
  #allocation0 [shape = 'u32[]', space=smem, size = 0x4, offset = 0x4, fixed_abs, tag = 'smem constant byte address 0x4 - core index']
  #allocation1 [shape = 'u32[144,128]{1,0:T(1,128)}', space=vmem, size = 0x12000, scoped, tag = 'internal scratch']
  %s0 = inlined_call_operand.vmem [shape: s32[32,8], index: 0, kind: input, shape index: {}]
  %s1 = inlined_call_operand.hbm [shape: f32[32,128], index: 1, kind: output, shape index: {}]
  %s2 = sld [smem:[#allocation0]]
  $region14: #{tpu_custom_call.1} parent=0
    _
  %s4 = ssub.s32 1, %s2
  %s5 = scalar_select 0, %s4, %s2
  $region1: #{tpu_custom_call.1} parent=0
    #allocation2 [shape = 'u8[16384]{0}', space=vmem, size = 0x4000, scoped, tag = 'output window, operand 0, single buffered']
    #allocation3 [shape = 's32[1]{0}', space=sflag, size = 0x4, scoped, tag = 'scoped memory for tpu_custom_call.1']
    %6 = vsyncpa [#allocation3], 0
    // Predicated region
    $region2: #{tpu_custom_call.1} parent=1 // pred_check
      _
    $region3: #{tpu_custom_call.1} parent=1 // pred_check_branch
      %8 = sbr.rel (0) target = $region5
    $region4: #{tpu_custom_call.1} parent=1 // pred_region
      _
    $region5: #{tpu_custom_call.1} parent=1 // pred_fallthru
      _
    %v9 = vlaneseq
    %v10 = vand.u32 %v9, 127
    %v11 = vld [vmem:[%s0] sm:$0xff]
    %v12 = vld [vmem:[%s0 + $0x8] sm:$0xff]
    %v13 = vld [vmem:[%s0 + $0x10] sm:$0xff]
    %v14 = vld [vmem:[%s0 + $0x18] sm:$0xff]
    %vm15 = vcmp.ge.s32.totalorder %v11, 0
    %vm16 = vcmp.ge.s32.totalorder %v12, 0
    %vm17 = vcmp.ge.s32.totalorder %v13, 0
    %vm18 = vcmp.ge.s32.totalorder %v14, 0
    %vm19 = vcmp.lt.s32.totalorder %v11, 16
    %vm20 = vcmp.lt.s32.totalorder %v12, 16
    %vm21 = vcmp.lt.s32.totalorder %v13, 16
    %vm22 = vcmp.lt.s32.totalorder %v14, 16
    %vm23 = vmand %vm15, %vm19
    %vm24 = vmand %vm16, %vm20
    %vm25 = vmand %vm17, %vm21
    %vm26 = vmand %vm18, %vm22
    %v27 = vsel %vm23, %v11, 4294967295
    %v28 = vsel %vm24, %v12, 4294967295
    %v29 = vsel %vm25, %v13, 4294967295
    %v30 = vsel %vm26, %v14, 4294967295
    %31 = vset.pattern.permute.xlu0 0
    %32 = vperm.xlu0 %31, %v27
    %v33 = vpop.permute.xlu0 %32
    %34 = vset.pattern.permute.xlu0 0
    %35 = vperm.xlu0 %34, %v28
    %v36 = vpop.permute.xlu0 %35
    %37 = vset.pattern.permute.xlu0 0
    %38 = vperm.xlu0 %37, %v29
    %v39 = vpop.permute.xlu0 %38
    %40 = vset.pattern.permute.xlu0 0
    %41 = vperm.xlu0 %40, %v30
    %v42 = vpop.permute.xlu0 %41
    %vm43 = vcmp.eq.s32.totalorder %v10, %v33
    %vm44 = vcmp.eq.s32.totalorder %v10, %v36
    %vm45 = vcmp.eq.s32.totalorder %v10, %v39
    %vm46 = vcmp.eq.s32.totalorder %v10, %v42
    %v47 = vadd.s32 %v11, 16
    %v48 = vadd.s32 %v12, 16
    %v49 = vadd.s32 %v13, 16
    %v50 = vadd.s32 %v14, 16
    %v51 = vsel %vm23, %v47, 4294967295
    %v52 = vsel %vm24, %v48, 4294967295
    %v53 = vsel %vm25, %v49, 4294967295
    %v54 = vsel %vm26, %v50, 4294967295
    %55 = vset.pattern.permute.xlu0 1
    %56 = vperm.xlu0 %55, %v51
    %v57 = vpop.permute.xlu0 %56
    %58 = vset.pattern.permute.xlu0 1
    %59 = vperm.xlu0 %58, %v52
    %v60 = vpop.permute.xlu0 %59
    %61 = vset.pattern.permute.xlu0 1
    %62 = vperm.xlu0 %61, %v53
    %v63 = vpop.permute.xlu0 %62
    %64 = vset.pattern.permute.xlu0 1
    %65 = vperm.xlu0 %64, %v54
    %v66 = vpop.permute.xlu0 %65
    %vm67 = vcmp.eq.s32.totalorder %v10, %v57
    %vm68 = vcmp.eq.s32.totalorder %v10, %v60
    %vm69 = vcmp.eq.s32.totalorder %v10, %v63
    %vm70 = vcmp.eq.s32.totalorder %v10, %v66
    %vm71 = vmor %vm43, %vm67
    %vm72 = vmor %vm44, %vm68
    %vm73 = vmor %vm45, %vm69
    %vm74 = vmor %vm46, %vm70
    %v75 = vadd.s32 %v11, 32
    %v76 = vadd.s32 %v12, 32
    %v77 = vadd.s32 %v13, 32
    %v78 = vadd.s32 %v14, 32
    %v79 = vsel %vm23, %v75, 4294967295
    %v80 = vsel %vm24, %v76, 4294967295
    %v81 = vsel %vm25, %v77, 4294967295
    %v82 = vsel %vm26, %v78, 4294967295
    %83 = vset.pattern.permute.xlu0 2
    %84 = vperm.xlu0 %83, %v79
    %v85 = vpop.permute.xlu0 %84
    %86 = vset.pattern.permute.xlu0 2
    %87 = vperm.xlu0 %86, %v80
    %v88 = vpop.permute.xlu0 %87
    %89 = vset.pattern.permute.xlu0 2
    %90 = vperm.xlu0 %89, %v81
    %v91 = vpop.permute.xlu0 %90
    %92 = vset.pattern.permute.xlu0 2
    %93 = vperm.xlu0 %92, %v82
    %v94 = vpop.permute.xlu0 %93
    %vm95 = vcmp.eq.s32.totalorder %v10, %v85
    %vm96 = vcmp.eq.s32.totalorder %v10, %v88
    %vm97 = vcmp.eq.s32.totalorder %v10, %v91
    %vm98 = vcmp.eq.s32.totalorder %v10, %v94
    %vm99 = vmor %vm71, %vm95
    %vm100 = vmor %vm72, %vm96
    %vm101 = vmor %vm73, %vm97
    %vm102 = vmor %vm74, %vm98
    %v103 = vadd.s32 %v11, 48
    %v104 = vadd.s32 %v12, 48
    %v105 = vadd.s32 %v13, 48
    %v106 = vadd.s32 %v14, 48
    %v107 = vsel %vm23, %v103, 4294967295
    %v108 = vsel %vm24, %v104, 4294967295
    %v109 = vsel %vm25, %v105, 4294967295
    %v110 = vsel %vm26, %v106, 4294967295
    %111 = vset.pattern.permute.xlu0 3
    %112 = vperm.xlu0 %111, %v107
    %v113 = vpop.permute.xlu0 %112
    %114 = vset.pattern.permute.xlu0 3
    %115 = vperm.xlu0 %114, %v108
    %v116 = vpop.permute.xlu0 %115
    %117 = vset.pattern.permute.xlu0 3
    %118 = vperm.xlu0 %117, %v109
    %v119 = vpop.permute.xlu0 %118
    %120 = vset.pattern.permute.xlu0 3
    %121 = vperm.xlu0 %120, %v110
    %v122 = vpop.permute.xlu0 %121
    %vm123 = vcmp.eq.s32.totalorder %v10, %v113
    %vm124 = vcmp.eq.s32.totalorder %v10, %v116
    %vm125 = vcmp.eq.s32.totalorder %v10, %v119
    %vm126 = vcmp.eq.s32.totalorder %v10, %v122
    %vm127 = vmor %vm99, %vm123
    %vm128 = vmor %vm100, %vm124
    %vm129 = vmor %vm101, %vm125
    %vm130 = vmor %vm102, %vm126
    %v131 = vadd.s32 %v11, 64
    %v132 = vadd.s32 %v12, 64
    %v133 = vadd.s32 %v13, 64
    %v134 = vadd.s32 %v14, 64
    %v135 = vsel %vm23, %v131, 4294967295
    %v136 = vsel %vm24, %v132, 4294967295
    %v137 = vsel %vm25, %v133, 4294967295
    %v138 = vsel %vm26, %v134, 4294967295
    %139 = vset.pattern.permute.xlu0 4
    %140 = vperm.xlu0 %139, %v135
    %v141 = vpop.permute.xlu0 %140
    %142 = vset.pattern.permute.xlu0 4
    %143 = vperm.xlu0 %142, %v136
    %v144 = vpop.permute.xlu0 %143
    %145 = vset.pattern.permute.xlu0 4
    %146 = vperm.xlu0 %145, %v137
    %v147 = vpop.permute.xlu0 %146
    %148 = vset.pattern.permute.xlu0 4
    %149 = vperm.xlu0 %148, %v138
    %v150 = vpop.permute.xlu0 %149
    %vm151 = vcmp.eq.s32.totalorder %v10, %v141
    %vm152 = vcmp.eq.s32.totalorder %v10, %v144
    %vm153 = vcmp.eq.s32.totalorder %v10, %v147
    %vm154 = vcmp.eq.s32.totalorder %v10, %v150
    %vm155 = vmor %vm127, %vm151
    %vm156 = vmor %vm128, %vm152
    %vm157 = vmor %vm129, %vm153
    %vm158 = vmor %vm130, %vm154
    %v159 = vadd.s32 %v11, 80
    %v160 = vadd.s32 %v12, 80
    %v161 = vadd.s32 %v13, 80
    %v162 = vadd.s32 %v14, 80
    %v163 = vsel %vm23, %v159, 4294967295
    %v164 = vsel %vm24, %v160, 4294967295
    %v165 = vsel %vm25, %v161, 4294967295
    %v166 = vsel %vm26, %v162, 4294967295
    %167 = vset.pattern.permute.xlu0 5
    %168 = vperm.xlu0 %167, %v163
    %v169 = vpop.permute.xlu0 %168
    %170 = vset.pattern.permute.xlu0 5
    %171 = vperm.xlu0 %170, %v164
    %v172 = vpop.permute.xlu0 %171
    %173 = vset.pattern.permute.xlu0 5
    %174 = vperm.xlu0 %173, %v165
    %v175 = vpop.permute.xlu0 %174
    %176 = vset.pattern.permute.xlu0 5
    %177 = vperm.xlu0 %176, %v166
    %v178 = vpop.permute.xlu0 %177
    %vm179 = vcmp.eq.s32.totalorder %v10, %v169
    %vm180 = vcmp.eq.s32.totalorder %v10, %v172
    %vm181 = vcmp.eq.s32.totalorder %v10, %v175
    %vm182 = vcmp.eq.s32.totalorder %v10, %v178
    %vm183 = vmor %vm155, %vm179
    %vm184 = vmor %vm156, %vm180
    %vm185 = vmor %vm157, %vm181
    %vm186 = vmor %vm158, %vm182
    %v187 = vadd.s32 %v11, 96
    %v188 = vadd.s32 %v12, 96
    %v189 = vadd.s32 %v13, 96
    %v190 = vadd.s32 %v14, 96
    %v191 = vsel %vm23, %v187, 4294967295
    %v192 = vsel %vm24, %v188, 4294967295
    %v193 = vsel %vm25, %v189, 4294967295
    %v194 = vsel %vm26, %v190, 4294967295
    %195 = vset.pattern.permute.xlu0 6
    %196 = vperm.xlu0 %195, %v191
    %v197 = vpop.permute.xlu0 %196
    %198 = vset.pattern.permute.xlu0 6
    %199 = vperm.xlu0 %198, %v192
    %v200 = vpop.permute.xlu0 %199
    %201 = vset.pattern.permute.xlu0 6
    %202 = vperm.xlu0 %201, %v193
    %v203 = vpop.permute.xlu0 %202
    %204 = vset.pattern.permute.xlu0 6
    %205 = vperm.xlu0 %204, %v194
    %v206 = vpop.permute.xlu0 %205
    %vm207 = vcmp.eq.s32.totalorder %v10, %v197
    %vm208 = vcmp.eq.s32.totalorder %v10, %v200
    %vm209 = vcmp.eq.s32.totalorder %v10, %v203
    %vm210 = vcmp.eq.s32.totalorder %v10, %v206
    %vm211 = vmor %vm183, %vm207
    %vm212 = vmor %vm184, %vm208
    %vm213 = vmor %vm185, %vm209
    %vm214 = vmor %vm186, %vm210
    %v215 = vadd.s32 %v11, 112
    %v216 = vadd.s32 %v12, 112
    %v217 = vadd.s32 %v13, 112
    %v218 = vadd.s32 %v14, 112
    %v219 = vsel %vm23, %v215, 4294967295
    %v220 = vsel %vm24, %v216, 4294967295
    %v221 = vsel %vm25, %v217, 4294967295
    %v222 = vsel %vm26, %v218, 4294967295
    %223 = vset.pattern.permute.xlu0 7
    %224 = vperm.xlu0 %223, %v219
    %v225 = vpop.permute.xlu0 %224
    %226 = vset.pattern.permute.xlu0 7
    %227 = vperm.xlu0 %226, %v220
    %v228 = vpop.permute.xlu0 %227
    %229 = vset.pattern.permute.xlu0 7
    %230 = vperm.xlu0 %229, %v221
    %v231 = vpop.permute.xlu0 %230
    %232 = vset.pattern.permute.xlu0 7
    %233 = vperm.xlu0 %232, %v222
    %v234 = vpop.permute.xlu0 %233
    %vm235 = vcmp.eq.s32.totalorder %v10, %v225
    %vm236 = vcmp.eq.s32.totalorder %v10, %v228
    %vm237 = vcmp.eq.s32.totalorder %v10, %v231
    %vm238 = vcmp.eq.s32.totalorder %v10, %v234
    %vm239 = vmor %vm211, %vm235
    %vm240 = vmor %vm212, %vm236
    %vm241 = vmor %vm213, %vm237
    %vm242 = vmor %vm214, %vm238
    %v243 = vsel %vm239, 1, 0
    %v244 = vsel %vm240, 1, 0
    %v245 = vsel %vm241, 1, 0
    %v246 = vsel %vm242, 1, 0
    %v247 = vcvt.s32.f32 %v243
    %v248 = vcvt.s32.f32 %v244
    %v249 = vcvt.s32.f32 %v245
    %v250 = vcvt.s32.f32 %v246
    %251 = vst [vmem:[#allocation2] sm:$0xff] %v247
    %252 = vst [vmem:[#allocation2 + $0x8] sm:$0xff] %v248
    %253 = vst [vmem:[#allocation2 + $0x10] sm:$0xff] %v249
    %254 = vst [vmem:[#allocation2 + $0x18] sm:$0xff] %v250
    // Predicated region
    $region6: #{tpu_custom_call.1} parent=1 // pred_check
      _
    $region7: #{tpu_custom_call.1} parent=1 // pred_check_branch
      %256 = sbr.rel (0) target = $region9
    $region8: #{tpu_custom_call.1} parent=1 // pred_region
      %s258 = ssub.s32 512, 512
      %259 = vsyncadd [#allocation3], %s258
      %s260 = sshll.u32 [#allocation2], 4
      %s261 = int_to_ptr.vmem [resolvable:$true] %s260
      %266 = dma.vmem_to_hbm [thread:$0]  %s261, 512, %s1, [#allocation3], 128, 128, 8
    $region9: #{tpu_custom_call.1} parent=1 // pred_fallthru
      _
    // Predicated region
    $region10: #{tpu_custom_call.1} parent=1 // pred_check
      _
    $region11: #{tpu_custom_call.1} parent=1 // pred_check_branch
      %268 = sbr.rel (0) target = $region13
    $region12: #{tpu_custom_call.1} parent=1 // pred_region
      %269 = dma.done [#allocation3], 512
    $region13: #{tpu_custom_call.1} parent=1 // pred_fallthru
      _
    %270 = vsyncpa [#allocation3], 1

</llo_original>
